<compile_context>
chip_gen: v6e
topology: v6e:2x2x1
jax: 0.10.0
libtpu: 0.0.40
codegen_flags: <defaults>
</compile_context>

<pallas_src>
import functools

import jax
import jax.numpy as jnp
from jax import lax
from jax.experimental import pallas as pl
from jax.experimental.pallas import tpu as pltpu

_LANES = 128
_SUBLANES = 8


def _heatmap_loss_kernel(pred_ref, gt_ref, o_ref, acc_ref, *,
                         tb, r_blk, r_total, inv_m, needs_row_mask):
    """Grid = (batch_blocks, reduction_chunks).

    pred_ref / gt_ref : (tb, r_blk, 128) chunk of the flattened heatmaps
    o_ref             : (tb, 128) per-sample result tile (lane+sublane dense)
    acc_ref           : (tb, 8, 128) float32 running elementwise accumulator
    """
    j = pl.program_id(1)
    last = pl.num_programs(1) - 1

    @pl.when(j == 0)
    def _():
        acc_ref[...] = jnp.zeros_like(acc_ref)

    g_full = r_blk // _SUBLANES           # full (8, 128) row groups per chunk
    r_rem = r_blk - g_full * _SUBLANES    # ragged rows (single-chunk case only)

    def accumulate(apply_row_mask):
        for b in range(tb):               # static unroll, tb <= 8
            def body(g, acc):
                r0 = pl.multiple_of(g * _SUBLANES, _SUBLANES)
                p = pred_ref[b, pl.ds(r0, _SUBLANES), :].astype(jnp.float32)
                q = gt_ref[b, pl.ds(r0, _SUBLANES), :].astype(jnp.float32)
                d = p - q
                sq = d * d
                if apply_row_mask:
                    rows = (j * r_blk + r0 +
                            lax.broadcasted_iota(jnp.int32,
                                                 (_SUBLANES, _LANES), 0))
                    sq = jnp.where(rows < r_total, sq, 0.0)
                return acc + sq

            acc = acc_ref[b]
            if g_full > 0:
                acc = lax.fori_loop(0, g_full, body, acc,
                                    unroll=min(8, g_full))
            acc_ref[b] = acc

            if r_rem > 0:
                # Only reachable when the whole reduction fits in one chunk
                # (r_blk == r_total), so no row mask is ever needed here.
                r0 = g_full * _SUBLANES
                p = pred_ref[b, pl.ds(r0, r_rem), :].astype(jnp.float32)
                q = gt_ref[b, pl.ds(r0, r_rem), :].astype(jnp.float32)
                d = p - q
                acc_ref[b, pl.ds(0, r_rem), :] = (
                    acc_ref[b, pl.ds(0, r_rem), :] + d * d)

    if needs_row_mask:
        @pl.when(j != last)
        def _():
            accumulate(False)

        @pl.when(j == last)
        def _():
            accumulate(True)
    else:
        accumulate(False)

    @pl.when(j == last)
    def _():
        # One cross-lane/sublane reduce + scale per sample, once per kernel.
        for b in range(tb):
            s = jnp.sum(acc_ref[b])
            o_ref[pl.ds(b, 1), :] = jnp.full((1, _LANES), s * inv_m,
                                             jnp.float32)


def heatmap_loss(pred, gt, *, target_block_bytes=2 * 1024 * 1024):
    """Per-sample MSE over (C, H, W).  pred, gt: (N, C, H, W) -> (N,) float32."""
    assert pred.shape == gt.shape, (pred.shape, gt.shape)
    n, c, h, w = pred.shape
    m = c * h * w

    # Flatten the reduction axes onto (rows, 128 lanes): fully packed tiles.
    if m % _LANES == 0:
        r_total = m // _LANES
        pred3 = pred.reshape(n, r_total, _LANES)
        gt3 = gt.reshape(n, r_total, _LANES)
    else:
        # Rare fallback: zero-pad the flattened axis to a lane multiple (one
        # extra HBM pass).  Identical zero padding on both inputs contributes
        # 0 to the squared-difference sum; we still divide by the true m.
        pad = _LANES - (m % _LANES)
        r_total = (m + pad) // _LANES
        pred3 = jnp.pad(pred.reshape(n, m), ((0, 0), (0, pad))).reshape(
            n, r_total, _LANES)
        gt3 = jnp.pad(gt.reshape(n, m), ((0, 0), (0, pad))).reshape(
            n, r_total, _LANES)

    # Batch-block so small per-sample heatmaps still make multi-MiB DMAs.
    tb = min(n, _SUBLANES)

    # Rows per reduction chunk: ~target_block_bytes of f32 per input block
    # (default 2 MiB -> 8 MiB total with 2 inputs x double-buffering; safe on
    # v5e/v6e/v7x.  Raise to ~4 MiB per input on v6e/v7x for more overlap).
    r_max = max(_SUBLANES,
                (target_block_bytes // (tb * _LANES * 4))
                // _SUBLANES * _SUBLANES)
    r_blk = r_total if r_total <= r_max else r_max
    n_chunks = pl.cdiv(r_total, r_blk)
    needs_row_mask = (r_total % r_blk) != 0

    kernel = functools.partial(
        _heatmap_loss_kernel, tb=tb, r_blk=r_blk, r_total=r_total,
        inv_m=1.0 / float(m), needs_row_mask=needs_row_mask)

    out = pl.pallas_call(
        kernel,
        out_shape=jax.ShapeDtypeStruct((n, _LANES), jnp.float32),
        grid_spec=pltpu.PrefetchScalarGridSpec(
            num_scalar_prefetch=0,
            grid=(pl.cdiv(n, tb), n_chunks),           # reduction axis last
            in_specs=[
                pl.BlockSpec((tb, r_blk, _LANES), lambda i, j: (i, j, 0)),
                pl.BlockSpec((tb, r_blk, _LANES), lambda i, j: (i, j, 0)),
            ],
            out_specs=pl.BlockSpec((tb, _LANES), lambda i, j: (i, 0)),
            scratch_shapes=[pltpu.VMEM((tb, _SUBLANES, _LANES), jnp.float32)],
        ),
        compiler_params=pltpu.CompilerParams(
            dimension_semantics=("parallel", "arbitrary"),
            vmem_limit_bytes=32 * 1024 * 1024,
        ),
    )(pred3, gt3)

    # Every lane of a sample's output row holds the same mean; take lane 0.
    return out[:, 0]


if __name__ == "__main__":
    # Small deterministic example consistent with HeatmapLoss(pred, gt).
    N, C, H, W = 2, 4, 16, 16

    key = jax.random.PRNGKey(0)
    kp, kg = jax.random.split(key)
    pred = jax.random.normal(kp, (N, C, H, W), dtype=jnp.float32)
    gt = jax.random.uniform(kg, (N, C, H, W), dtype=jnp.float32)

    loss = heatmap_loss(pred, gt)
    loss = jax.block_until_ready(loss)

    # Pure-JAX reference.
    ref = jnp.mean((pred - gt) ** 2, axis=(1, 2, 3))
    assert loss.shape == (N,)
    assert jnp.allclose(loss, ref, atol=1e-5, rtol=1e-5)

    print("KERNEL_OK")
</pallas_src>

<mosaic_0001>
module attributes {stable_mosaic.version = 11 : i64} {
  func.func @_heatmap_loss_kernel(%arg0: i32, %arg1: i32, %arg2: memref<2x8x128xf32, #tpu.memory_space<vmem>>, %arg3: memref<2x8x128xf32, #tpu.memory_space<vmem>>, %arg4: memref<2x128xf32, #tpu.memory_space<vmem>>, %arg5: memref<2x8x128xf32, #tpu.memory_space<vmem>>) attributes {dimension_semantics = [#tpu.dimension_semantics<parallel>, #tpu.dimension_semantics<arbitrary>], iteration_bounds = array<i64: 1, 1>, scalar_prefetch = 0 : i64, scratch_operands = 1 : i64, tpu.core_type = #tpu.core_type<tc>, window_params = [{transform_indices = @transform_0, window_bounds = array<i64: 2, 8, 128>}, {transform_indices = @transform_1, window_bounds = array<i64: 2, 8, 128>}, {transform_indices = @transform_2, window_bounds = array<i64: 2, 128>}]} {
    %c0_i32 = arith.constant 0 : i32
    %0 = arith.cmpi eq, %arg1, %c0_i32 : i32
    %1 = arith.extui %0 : i1 to i32
    %c0_i32_0 = arith.constant 0 : i32
    %2 = arith.cmpi ne, %1, %c0_i32_0 : i32
    scf.if %2 {
      %cst = arith.constant 0.000000e+00 : f32
      %38 = vector.broadcast %cst : f32 to vector<2x8x128xf32>
      %c0_25 = arith.constant 0 : index
      %c0_26 = arith.constant 0 : index
      %c0_27 = arith.constant 0 : index
      %39 = vector.load %arg5[%c0_25, %c0_26, %c0_27] : memref<2x8x128xf32, #tpu.memory_space<vmem>>, vector<2x8x128xf32>
      tpu.vector_store %arg5[%c0_25, %c0_26, %c0_27], %38 {strides = array<i32>} : memref<2x8x128xf32, #tpu.memory_space<vmem>>, vector<2x8x128xf32>,
    } else {
    }
    %c0 = arith.constant 0 : index
    %c0_1 = arith.constant 0 : index
    %c0_2 = arith.constant 0 : index
    %3 = vector.load %arg5[%c0, %c0_1, %c0_2] : memref<2x8x128xf32, #tpu.memory_space<vmem>>, vector<1x8x128xf32>
    %4 = vector.shape_cast %3 : vector<1x8x128xf32> to vector<8x128xf32>
    %c0_i32_3 = arith.constant 0 : i32
    %c8_i32 = arith.constant 8 : i32
    %5 = arith.muli %c0_i32_3, %c8_i32 : i32
    %6 = tpu.assume_multiple %5, 8 : i32
    %c0_4 = arith.constant 0 : index
    %7 = arith.index_cast %6 : i32 to index
    %c0_5 = arith.constant 0 : index
    %8 = vector.load %arg2[%c0_4, %7, %c0_5] : memref<2x8x128xf32, #tpu.memory_space<vmem>>, vector<1x8x128xf32>
    %9 = vector.shape_cast %8 : vector<1x8x128xf32> to vector<8x128xf32>
    %c0_6 = arith.constant 0 : index
    %10 = arith.index_cast %6 : i32 to index
    %c0_7 = arith.constant 0 : index
    %11 = vector.load %arg3[%c0_6, %10, %c0_7] : memref<2x8x128xf32, #tpu.memory_space<vmem>>, vector<1x8x128xf32>
    %12 = vector.shape_cast %11 : vector<1x8x128xf32> to vector<8x128xf32>
    %13 = arith.subf %9, %12 : vector<8x128xf32>
    %14 = arith.mulf %13, %13 : vector<8x128xf32>
    %15 = arith.addf %4, %14 : vector<8x128xf32>
    %c1_i32 = arith.constant 1 : i32
    %c0_8 = arith.constant 0 : index
    %c0_9 = arith.constant 0 : index
    %c0_10 = arith.constant 0 : index
    %16 = vector.load %arg5[%c0_8, %c0_9, %c0_10] : memref<2x8x128xf32, #tpu.memory_space<vmem>>, vector<1x8x128xf32>
    %17 = vector.shape_cast %16 : vector<1x8x128xf32> to vector<8x128xf32>
    %18 = vector.shape_cast %15 : vector<8x128xf32> to vector<1x8x128xf32>
    tpu.vector_store %arg5[%c0_8, %c0_9, %c0_10], %18 {strides = array<i32>} : memref<2x8x128xf32, #tpu.memory_space<vmem>>, vector<1x8x128xf32>,
    %c1 = arith.constant 1 : index
    %c0_11 = arith.constant 0 : index
    %c0_12 = arith.constant 0 : index
    %19 = vector.load %arg5[%c1, %c0_11, %c0_12] : memref<2x8x128xf32, #tpu.memory_space<vmem>>, vector<1x8x128xf32>
    %20 = vector.shape_cast %19 : vector<1x8x128xf32> to vector<8x128xf32>
    %c0_i32_13 = arith.constant 0 : i32
    %c8_i32_14 = arith.constant 8 : i32
    %21 = arith.muli %c0_i32_13, %c8_i32_14 : i32
    %22 = tpu.assume_multiple %21, 8 : i32
    %c1_15 = arith.constant 1 : index
    %23 = arith.index_cast %22 : i32 to index
    %c0_16 = arith.constant 0 : index
    %24 = vector.load %arg2[%c1_15, %23, %c0_16] : memref<2x8x128xf32, #tpu.memory_space<vmem>>, vector<1x8x128xf32>
    %25 = vector.shape_cast %24 : vector<1x8x128xf32> to vector<8x128xf32>
    %c1_17 = arith.constant 1 : index
    %26 = arith.index_cast %22 : i32 to index
    %c0_18 = arith.constant 0 : index
    %27 = vector.load %arg3[%c1_17, %26, %c0_18] : memref<2x8x128xf32, #tpu.memory_space<vmem>>, vector<1x8x128xf32>
    %28 = vector.shape_cast %27 : vector<1x8x128xf32> to vector<8x128xf32>
    %29 = arith.subf %25, %28 : vector<8x128xf32>
    %30 = arith.mulf %29, %29 : vector<8x128xf32>
    %31 = arith.addf %20, %30 : vector<8x128xf32>
    %c1_i32_19 = arith.constant 1 : i32
    %c1_20 = arith.constant 1 : index
    %c0_21 = arith.constant 0 : index
    %c0_22 = arith.constant 0 : index
    %32 = vector.load %arg5[%c1_20, %c0_21, %c0_22] : memref<2x8x128xf32, #tpu.memory_space<vmem>>, vector<1x8x128xf32>
    %33 = vector.shape_cast %32 : vector<1x8x128xf32> to vector<8x128xf32>
    %34 = vector.shape_cast %31 : vector<8x128xf32> to vector<1x8x128xf32>
    tpu.vector_store %arg5[%c1_20, %c0_21, %c0_22], %34 {strides = array<i32>} : memref<2x8x128xf32, #tpu.memory_space<vmem>>, vector<1x8x128xf32>,
    %c0_i32_23 = arith.constant 0 : i32
    %35 = arith.cmpi eq, %arg1, %c0_i32_23 : i32
    %36 = arith.extui %35 : i1 to i32
    %c0_i32_24 = arith.constant 0 : i32
    %37 = arith.cmpi ne, %36, %c0_i32_24 : i32
    scf.if %37 {
      %c0_25 = arith.constant 0 : index
      %c0_26 = arith.constant 0 : index
      %c0_27 = arith.constant 0 : index
      %38 = vector.load %arg5[%c0_25, %c0_26, %c0_27] : memref<2x8x128xf32, #tpu.memory_space<vmem>>, vector<1x8x128xf32>
      %39 = vector.shape_cast %38 : vector<1x8x128xf32> to vector<8x128xf32>
      %40 = vector.shape_cast %39 : vector<8x128xf32> to vector<1x8x128xf32>
      %cst = arith.constant dense<0.000000e+00> : vector<1xf32>
      %41 = vector.multi_reduction <add>, %40, %cst [1, 2] : vector<1x8x128xf32> to vector<1xf32>
      %42 = vector.shape_cast %41 : vector<1xf32> to vector<1x1x1xf32>
      %43 = vector.extract %42[0, 0, 0] : f32 from vector<1x1x1xf32>
      %cst_28 = arith.constant 9.765625E-4 : f32
      %44 = arith.mulf %43, %cst_28 : f32
      %45 = vector.broadcast %44 : f32 to vector<1x128xf32>
      %c0_29 = arith.constant 0 : index
      %c0_30 = arith.constant 0 : index
      %46 = vector.load %arg4[%c0_29, %c0_30] : memref<2x128xf32, #tpu.memory_space<vmem>>, vector<1x128xf32>
      tpu.vector_store %arg4[%c0_29, %c0_30], %45 {strides = array<i32>} : memref<2x128xf32, #tpu.memory_space<vmem>>, vector<1x128xf32>,
      %c1_31 = arith.constant 1 : index
      %c0_32 = arith.constant 0 : index
      %c0_33 = arith.constant 0 : index
      %47 = vector.load %arg5[%c1_31, %c0_32, %c0_33] : memref<2x8x128xf32, #tpu.memory_space<vmem>>, vector<1x8x128xf32>
      %48 = vector.shape_cast %47 : vector<1x8x128xf32> to vector<8x128xf32>
      %49 = vector.shape_cast %48 : vector<8x128xf32> to vector<1x8x128xf32>
      %cst_34 = arith.constant dense<0.000000e+00> : vector<1xf32>
      %50 = vector.multi_reduction <add>, %49, %cst_34 [1, 2] : vector<1x8x128xf32> to vector<1xf32>
      %51 = vector.shape_cast %50 : vector<1xf32> to vector<1x1x1xf32>
      %52 = vector.extract %51[0, 0, 0] : f32 from vector<1x1x1xf32>
      %cst_35 = arith.constant 9.765625E-4 : f32
      %53 = arith.mulf %52, %cst_35 : f32
      %54 = vector.broadcast %53 : f32 to vector<1x128xf32>
      %c1_36 = arith.constant 1 : index
      %c0_37 = arith.constant 0 : index
      %55 = vector.load %arg4[%c1_36, %c0_37] : memref<2x128xf32, #tpu.memory_space<vmem>>, vector<1x128xf32>
      tpu.vector_store %arg4[%c1_36, %c0_37], %54 {strides = array<i32>} : memref<2x128xf32, #tpu.memory_space<vmem>>, vector<1x128xf32>,
    } else {
    }
    return
  }
  func.func @transform_0(%arg0: i32, %arg1: i32) -> (i32, i32, i32) {
    %c0_i32 = arith.constant 0 : i32
    %c0_i32_0 = arith.constant 0 : i32
    return %arg0, %arg1, %c0_i32 : i32, i32, i32
  }
  func.func @transform_1(%arg0: i32, %arg1: i32) -> (i32, i32, i32) {
    %c0_i32 = arith.constant 0 : i32
    %c0_i32_0 = arith.constant 0 : i32
    return %arg0, %arg1, %c0_i32 : i32, i32, i32
  }
  func.func @transform_2(%arg0: i32, %arg1: i32) -> (i32, i32) {
    %c0_i32 = arith.constant 0 : i32
    %c0_i32_0 = arith.constant 0 : i32
    return %arg0, %c0_i32 : i32, i32
  }
}

</mosaic_0001>

<llo_original>
// kernel: tpu_custom_call.1
$region0: #{tpu_custom_call.1}
  #allocation0 [shape = 'u32[]', space=smem, size = 0x4, offset = 0x4, fixed_abs, tag = 'smem constant byte address 0x4 - core index']
  #allocation1 [shape = 'u32[144,128]{1,0:T(1,128)}', space=vmem, size = 0x12000, scoped, tag = 'internal scratch']
  #allocation2 [shape = 'f32[2,8,128]{2,1,0:T(8,128)}', space=vmem, size = 0x2000, scoped, tag = 'scratch operand']
  %s0 = inlined_call_operand.hbm [shape: f32[2,8,128], index: 0, kind: input, shape index: {}]
  %s1 = inlined_call_operand.hbm [shape: f32[2,8,128], index: 1, kind: input, shape index: {}]
  %s2 = inlined_call_operand.hbm [shape: f32[2,128], index: 2, kind: output, shape index: {}]
  %s3 = sld [smem:[#allocation0]]
  $region34: #{tpu_custom_call.1} parent=0
    _
  %s5 = ssub.s32 1, %s3
  %s6 = scalar_select 0, %s5, %s3
  $region1: #{tpu_custom_call.1} parent=0
    #allocation3 [shape = 'u8[8192]{0}', space=vmem, size = 0x2000, scoped, tag = 'input window, operand 0, single buffered']
    #allocation4 [shape = 's32[1]{0}', space=sflag, size = 0x4, scoped, tag = 'scoped memory for tpu_custom_call.1']
    #allocation5 [shape = 's32[1]{0}', space=sflag, size = 0x4, scoped, tag = 'scoped memory for tpu_custom_call.1']
    #allocation6 [shape = 'u8[8192]{0}', space=vmem, size = 0x2000, scoped, tag = 'input window, operand 1, single buffered']
    #allocation7 [shape = 's32[1]{0}', space=sflag, size = 0x4, scoped, tag = 'scoped memory for tpu_custom_call.1']
    #allocation8 [shape = 'u8[1024]{0}', space=vmem, size = 0x400, scoped, tag = 'output window, operand 0, single buffered']
    %7 = vsyncpa [#allocation4], 0
    %8 = vsyncpa [#allocation7], 0
    %9 = vsyncpa [#allocation5], 0
    // Predicated region
    $region2: #{tpu_custom_call.1} parent=1 // pred_check
      _
    $region3: #{tpu_custom_call.1} parent=1 // pred_check_branch
      %11 = sbr.rel (0) target = $region5
    $region4: #{tpu_custom_call.1} parent=1 // pred_region
      %s13 = ssub.s32 256, 256
      %14 = vsyncadd [#allocation4], %s13
      %s15 = sshll.u32 [#allocation3], 4
      %s16 = int_to_ptr.vmem [resolvable:$true] %s15
      %21 = dma.hbm_to_vmem [thread:$0]  %s0, 256, %s16, [#allocation4], 128, 128, 8
    $region5: #{tpu_custom_call.1} parent=1 // pred_fallthru
      _
    // Predicated region
    $region6: #{tpu_custom_call.1} parent=1 // pred_check
      _
    $region7: #{tpu_custom_call.1} parent=1 // pred_check_branch
      %23 = sbr.rel (0) target = $region9
    $region8: #{tpu_custom_call.1} parent=1 // pred_region
      %s25 = ssub.s32 256, 256
      %26 = vsyncadd [#allocation7], %s25
      %s27 = sshll.u32 [#allocation6], 4
      %s28 = int_to_ptr.vmem [resolvable:$true] %s27
      %33 = dma.hbm_to_vmem [thread:$0]  %s1, 256, %s28, [#allocation7], 128, 128, 8
    $region9: #{tpu_custom_call.1} parent=1 // pred_fallthru
      _
    // Predicated region
    $region10: #{tpu_custom_call.1} parent=1 // pred_check
      _
    $region11: #{tpu_custom_call.1} parent=1 // pred_check_branch
      %35 = sbr.rel (0) target = $region13
    $region12: #{tpu_custom_call.1} parent=1 // pred_region
      %36 = dma.done [#allocation4], 256
    $region13: #{tpu_custom_call.1} parent=1 // pred_fallthru
      _
    // Predicated region
    $region14: #{tpu_custom_call.1} parent=1 // pred_check
      _
    $region15: #{tpu_custom_call.1} parent=1 // pred_check_branch
      %38 = sbr.rel (0) target = $region17
    $region16: #{tpu_custom_call.1} parent=1 // pred_region
      %39 = dma.done [#allocation7], 256
    $region17: #{tpu_custom_call.1} parent=1 // pred_fallthru
      _
    %p40 = scmp.eq.s32.totalorder 0, 0
    // Predicated region
    $region18: #{tpu_custom_call.1} parent=1 // pred_check
      %p41 = pneg %p40
    $region19: #{tpu_custom_call.1} parent=1 // pred_check_branch
      %43 = sbr.rel (%p41) target = $region21
    $region20: #{tpu_custom_call.1} parent=1 // pred_region
      %44 = vst [vmem:[#allocation2] sm:$0xff] 0.0
      %45 = vst [vmem:[#allocation2 + $0x8] sm:$0xff] 0.0
    $region21: #{tpu_custom_call.1} parent=1 // pred_fallthru
      _
    %v46 = vld [vmem:[#allocation2] sm:$0xff]
    %v47 = vld [vmem:[#allocation3] sm:$0xff]
    %v48 = vld [vmem:[#allocation6] sm:$0xff]
    %v49 = vsub.f32 %v47, %v48
    %v50 = vmul.f32 %v49, %v49
    %v51 = vadd.f32 %v46, %v50
    %52 = vst [vmem:[#allocation2] sm:$0xff] %v51
    %s53 = scalar_lea.vmem [#allocation2], 8
    %v54 = vld [vmem:[%s53] sm:$0xff]
    %s55 = sadd.s32 0, 8
    %s56 = scalar_lea.vmem [#allocation3], %s55
    %v57 = vld [vmem:[%s56] sm:$0xff]
    %s58 = scalar_lea.vmem [#allocation6], %s55
    %v59 = vld [vmem:[%s58] sm:$0xff]
    %v60 = vsub.f32 %v57, %v59
    %v61 = vmul.f32 %v60, %v60
    %v62 = vadd.f32 %v54, %v61
    %63 = vst [vmem:[%s53] sm:$0xff] %v62
    // Predicated region
    $region22: #{tpu_custom_call.1} parent=1 // pred_check
      %p64 = pneg %p40
    $region23: #{tpu_custom_call.1} parent=1 // pred_check_branch
      %66 = sbr.rel (%p64) target = $region25
    $region24: #{tpu_custom_call.1} parent=1 // pred_region
      %v67 = vld [vmem:[#allocation2] sm:$0xff]
      %68 = vadd.xlane.f32.xlu0 %v67
      %v69 = vpop.xlane.xlu0 %68
      %v70 = vrot.slane %v69, 4
      %v71 = vadd.f32 %v69, %v70
      %v72 = vrot.slane %v71, 2
      %v73 = vadd.f32 %v71, %v72
      %v74 = vrot.slane %v73, 1
      %v75 = vadd.f32 %v73, %v74
      %s76 = vtos %v75
      %s77 = smul.f32 %s76, 0.0009765625
      %v78 = vstv %s77
      %79 = vst [vmem:[#allocation8] sm:$0x1] %v78
      %v80 = vld [vmem:[%s53] sm:$0xff]
      %81 = vadd.xlane.f32.xlu0 %v80
      %v82 = vpop.xlane.xlu0 %81
      %v83 = vrot.slane %v82, 4
      %v84 = vadd.f32 %v82, %v83
      %v85 = vrot.slane %v84, 2
      %v86 = vadd.f32 %v84, %v85
      %v87 = vrot.slane %v86, 1
      %v88 = vadd.f32 %v86, %v87
      %s89 = vtos %v88
      %s90 = smul.f32 %s89, 0.0009765625
      %v91 = vstv %s90
      %92 = vst [vmem:[#allocation8 + $0x1] sm:$0x1] %v91
    $region25: #{tpu_custom_call.1} parent=1 // pred_fallthru
      _
    // Predicated region
    $region26: #{tpu_custom_call.1} parent=1 // pred_check
      _
    $region27: #{tpu_custom_call.1} parent=1 // pred_check_branch
      %94 = sbr.rel (0) target = $region29
    $region28: #{tpu_custom_call.1} parent=1 // pred_region
      %s96 = ssub.s32 32, 32
      %97 = vsyncadd [#allocation5], %s96
      %s99 = sshll.u32 [#allocation8], 4
      %s100 = int_to_ptr.vmem [resolvable:$true] %s99
      %102 = dma.vmem_to_hbm [thread:$0]  %s100, 32, %s2, [#allocation5]
    $region29: #{tpu_custom_call.1} parent=1 // pred_fallthru
      _
    // Predicated region
    $region30: #{tpu_custom_call.1} parent=1 // pred_check
      _
    $region31: #{tpu_custom_call.1} parent=1 // pred_check_branch
      %104 = sbr.rel (0) target = $region33
    $region32: #{tpu_custom_call.1} parent=1 // pred_region
      %105 = dma.done [#allocation5], 32
    $region33: #{tpu_custom_call.1} parent=1 // pred_fallthru
      _
    %106 = vsyncpa [#allocation4], 1
    %107 = vsyncpa [#allocation7], 1
    %108 = vsyncpa [#allocation5], 1

</llo_original>
